<compile_context>
chip_gen: v7x
topology: tpu7x:2x2x1
jax: 0.10.0
libtpu: 0.0.40
codegen_flags: <defaults>
</compile_context>

<pallas_src>
import jax
import jax.numpy as jnp
from jax.experimental import pallas as pl
from jax.experimental.pallas import tpu as pltpu


def attention_gate_kernel(x_ref, wcol_ref, bsum_ref, wp_ref, bp_ref, o_ref):
    """One (C, t) spatial tile of one batch element.

    x_ref    : (C, T)    f32 VMEM   channels on sublanes, spatial on lanes
    wcol_ref : (C, C, 1) f32 VMEM   wcol[ci, co, 0] = folded (Wg+Wx)[co, ci]
    bsum_ref : (C, 1)    f32 VMEM   folded bg + bx       (per output channel)
    wp_ref   : (C, 1)    f32 VMEM   folded psi conv weights
    bp_ref   : (1, 1)    f32 VMEM   folded psi conv bias
    o_ref    : (C, T)    f32 VMEM
    """
    C, T = x_ref.shape
    x = x_ref[...]                                            # (C, T)

    # h[co, :] = bsum[co] + sum_ci wcol[ci, co] * x[ci, :]  -- all outputs at once.
    h = jnp.broadcast_to(bsum_ref[...], (C, T))               # (C,1) -> (C,T)
    for ci in range(C):                                       # static unroll, C tiny
        xb = jnp.broadcast_to(x[ci:ci + 1, :], (C, T))        # sublane broadcast of row ci
        h = h + wcol_ref[ci] * xb                             # (C,1)*(C,T) per-sublane MAC
    h = jnp.maximum(h, 0.0)                                   # single ReLU on (C, T)

    # psi pre-activation: weighted cross-sublane reduction (XLU), then EUP sigmoid.
    s = jnp.sum(wp_ref[...] * h, axis=0, keepdims=True)       # (1, T)
    s = s + bp_ref[...]                                       # (1, 1) broadcast
    d = 1.0 + jnp.exp(-s)                                     # exp on EUP
    r = pl.reciprocal(d, approx=True)                         # approx recip on EUP
    p = r * (2.0 - d * r)                                     # one Newton step -> f32 accuracy

    o_ref[...] = x * p                                        # p broadcast back over sublanes


def _cdiv(a, b):
    return -(-a // b)


def _pick_tile(hw, channels, n_batch, target_lanes, vmem_budget_bytes=16 * 1024 * 1024):
    """Pick the lane-tile size t and the number of spatial tiles.

    No host-side padding: with >1 tile, t is a multiple of 128 and the partial
    tail tile is handled by Pallas OOB masking; with a single tile, t == H*W
    exactly (full-dim block bypasses the 128-multiple rule)."""
    hw_units = _cdiv(hw, 128)
    max_units_target = max(1, target_lanes // 128)
    # Keep (in + out) * double-buffered footprint under ~16 MiB so v7x (64 MiB
    # total VMEM / TC, 32 MiB default scope) keeps full double buffering.
    bytes_per_unit = 4 * channels * 128 * 2 * 2
    max_units_vmem = max(1, vmem_budget_bytes // bytes_per_unit)
    t_units = max(1, min(hw_units, max_units_target, max_units_vmem))
    n_tiles = _cdiv(hw, t_units * 128)
    # v7x megacore balance: make sure the "parallel" grid has >= 2 steps.
    if n_batch * n_tiles < 2 and t_units >= 2:
        t_units = _cdiv(t_units, 2)
        n_tiles = _cdiv(hw, t_units * 128)
    if n_tiles == 1:
        return hw, 1                     # single full-dim block, no OOB lanes
    return t_units * 128, n_tiles


def attention_gate(x_nchw, wsum, bsum, wp, bp, *, tile_hw=131072):
    """Fused AttentionGate forward.

    x_nchw : (N, C, H, W) f32
    wsum   : (C, C)  folded (Wg + Wx)^T, indexed [c_in, c_out]
    bsum   : (C,)    folded bg + bx
    wp     : (C,)    folded psi conv weights
    bp     : (1,)    folded psi conv bias
    """
    N, C, H, W = x_nchw.shape
    HW = H * W
    x_flat = x_nchw.reshape(N, C, HW)                         # free reshape, no transpose

    t, n_tiles = _pick_tile(HW, C, N, tile_hw)
    grid = (N, n_tiles)

    # Tiny parameters pre-shaped as sublane column vectors for in-kernel broadcasting.
    wcol = wsum.reshape(C, C, 1).astype(jnp.float32)
    bsum_c = bsum.reshape(C, 1).astype(jnp.float32)
    wp_c = wp.reshape(C, 1).astype(jnp.float32)
    bp_c = bp.reshape(1, 1).astype(jnp.float32)

    out = pl.pallas_call(
        attention_gate_kernel,
        out_shape=jax.ShapeDtypeStruct((N, C, HW), jnp.float32),
        grid_spec=pltpu.PrefetchScalarGridSpec(
            num_scalar_prefetch=0,
            grid=grid,
            in_specs=[
                # x tile: squeeze batch dim, channels x spatial (lane-dense).
                pl.BlockSpec((None, C, t), lambda n, s: (n, 0, s)),
                # tiny folded weights / biases, whole-array VMEM blocks.
                pl.BlockSpec((C, C, 1), lambda n, s: (0, 0, 0)),
                pl.BlockSpec((C, 1), lambda n, s: (0, 0)),
                pl.BlockSpec((C, 1), lambda n, s: (0, 0)),
                pl.BlockSpec((1, 1), lambda n, s: (0, 0)),
            ],
            out_specs=pl.BlockSpec((None, C, t), lambda n, s: (n, 0, s)),
        ),
        compiler_params=pltpu.CompilerParams(
            dimension_semantics=("parallel", "parallel")),
    )(x_flat, wcol, bsum_c, wp_c, bp_c)

    return out.reshape(N, C, H, W)


def fold_bn(w, b, gamma, beta, mean, var, eps=1e-5):
    """Fold eval-mode BatchNorm into a 1x1 conv.  w: (C_out, C_in), b: (C_out,)."""
    scale = gamma / jnp.sqrt(var + eps)
    w_f = w * scale[:, None]
    b_f = (b - mean) * scale + beta
    return w_f, b_f


# ----------------------- pure-JAX reference (raw weights + BN) -----------------------
def _conv1x1(x, w, b):
    # x: (N, C_in, H, W), w: (C_out, C_in), b: (C_out,)
    return jnp.einsum('nchw,oc->nohw', x, w) + b[None, :, None, None]


def _bn_eval(x, gamma, beta, mean, var, eps=1e-5):
    s = (gamma / jnp.sqrt(var + eps))[None, :, None, None]
    return (x - mean[None, :, None, None]) * s + beta[None, :, None, None]


def reference(x, wg, bg, bn_g, wx, bx, bn_x, wp, bp, bn_p):
    g1 = _bn_eval(_conv1x1(x, wg, bg), *bn_g)
    x1 = _bn_eval(_conv1x1(x, wx, bx), *bn_x)
    h = jnp.maximum(g1 + x1, 0.0)
    p = jax.nn.sigmoid(_bn_eval(_conv1x1(h, wp, bp), *bn_p))
    return x * p


if __name__ == "__main__":
    F_int = 4
    key = jax.random.PRNGKey(0)
    ks = jax.random.split(key, 12)

    def rand_bn(k, c):
        k1, k2, k3, k4 = jax.random.split(k, 4)
        gamma = 1.0 + 0.2 * jax.random.normal(k1, (c,), jnp.float32)
        beta = 0.1 * jax.random.normal(k2, (c,), jnp.float32)
        mean = 0.3 * jax.random.normal(k3, (c,), jnp.float32)
        var = jnp.abs(1.0 + 0.2 * jax.random.normal(k4, (c,), jnp.float32)) + 0.1
        return gamma, beta, mean, var

    # Conv2d(F_int, F_int, 1) weights: (C_out, C_in); psi conv: (1, C_in).
    wg_raw = jax.random.normal(ks[1], (F_int, F_int), jnp.float32) * 0.5
    bg_raw = jax.random.normal(ks[2], (F_int,), jnp.float32) * 0.1
    wx_raw = jax.random.normal(ks[3], (F_int, F_int), jnp.float32) * 0.5
    bx_raw = jax.random.normal(ks[4], (F_int,), jnp.float32) * 0.1
    wp_raw = jax.random.normal(ks[5], (1, F_int), jnp.float32) * 0.5
    bp_raw = jax.random.normal(ks[6], (1,), jnp.float32) * 0.1

    # Non-trivial eval-mode BatchNorm running stats / affine params (validates fold_bn).
    bn_g = rand_bn(ks[7], F_int)
    bn_x = rand_bn(ks[8], F_int)
    bn_p = rand_bn(ks[9], 1)

    # Fold BN into the convs, then fold the two parallel branches (both read the same x):
    #   g1 + x1 = x @ (Wg + Wx)^T + (bg + bx)
    wg_f, bg_f = fold_bn(wg_raw, bg_raw, *bn_g)
    wx_f, bx_f = fold_bn(wx_raw, bx_raw, *bn_x)
    wp_f, bp_f = fold_bn(wp_raw, bp_raw, *bn_p)
    wsum = (wg_f + wx_f).T            # (C_in, C_out)
    bsum = bg_f + bx_f                # (C,)
    wp_k = wp_f.reshape(F_int)        # (C,)
    bp_k = bp_f.reshape(1)            # (1,)

    ok = True
    # Primary spec shape (2,4,16,16): one full 256-lane tile per image, grid (2,1).
    # Second shape (1,4,10,30): exercises the multi-tile path with a masked partial tail.
    for shape, kx in (((2, F_int, 16, 16), ks[10]), ((1, F_int, 10, 30), ks[11])):
        x = jax.random.normal(kx, shape, dtype=jnp.float32)
        y = jax.block_until_ready(attention_gate(x, wsum, bsum, wp_k, bp_k))
        y_ref = reference(x, wg_raw, bg_raw, bn_g, wx_raw, bx_raw, bn_x,
                          wp_raw, bp_raw, bn_p)
        ok = ok and (y.shape == shape)
        ok = ok and bool(jnp.allclose(y, y_ref, atol=1e-4, rtol=1e-4))
    assert ok
    print("KERNEL_OK")
</pallas_src>

<mosaic_0001>
module attributes {stable_mosaic.version = 11 : i64} {
  func.func @attention_gate_kernel(%arg0: i32, %arg1: i32, %arg2: memref<1x4x256xf32, #tpu.memory_space<vmem>>, %arg3: memref<4x4x1xf32, #tpu.memory_space<vmem>>, %arg4: memref<4x1xf32, #tpu.memory_space<vmem>>, %arg5: memref<4x1xf32, #tpu.memory_space<vmem>>, %arg6: memref<1x1xf32, #tpu.memory_space<vmem>>, %arg7: memref<1x4x256xf32, #tpu.memory_space<vmem>>) attributes {dimension_semantics = [#tpu.dimension_semantics<parallel>, #tpu.dimension_semantics<parallel>], iteration_bounds = array<i64: 2, 1>, scalar_prefetch = 0 : i64, scratch_operands = 0 : i64, tpu.core_type = #tpu.core_type<tc>, window_params = [{transform_indices = @transform_0, window_bounds = array<i64: 1, 4, 256>}, {pipeline_mode = #tpu.pipeline_mode<synchronous>, transform_indices = @transform_1, window_bounds = array<i64: 4, 4, 1>}, {pipeline_mode = #tpu.pipeline_mode<synchronous>, transform_indices = @transform_2, window_bounds = array<i64: 4, 1>}, {pipeline_mode = #tpu.pipeline_mode<synchronous>, transform_indices = @transform_3, window_bounds = array<i64: 4, 1>}, {pipeline_mode = #tpu.pipeline_mode<synchronous>, transform_indices = @transform_4, window_bounds = array<i64: 1, 1>}, {transform_indices = @transform_5, window_bounds = array<i64: 1, 4, 256>}]} {
    %c0 = arith.constant 0 : index
    %c0_0 = arith.constant 0 : index
    %c0_1 = arith.constant 0 : index
    %0 = vector.load %arg2[%c0, %c0_0, %c0_1] : memref<1x4x256xf32, #tpu.memory_space<vmem>>, vector<1x4x256xf32>
    %1 = vector.shape_cast %0 : vector<1x4x256xf32> to vector<4x256xf32>
    %c0_2 = arith.constant 0 : index
    %c0_3 = arith.constant 0 : index
    %2 = vector.load %arg4[%c0_2, %c0_3] : memref<4x1xf32, #tpu.memory_space<vmem>>, vector<4x1xf32>
    %3 = vector.shape_cast %2 : vector<4x1xf32> to vector<4x1xf32>
    %4 = vector.broadcast %3 : vector<4x1xf32> to vector<4x256xf32>
    %5 = vector.extract_strided_slice %1 {offsets = [0, 0], sizes = [1, 256], strides = [1, 1]} : vector<4x256xf32> to vector<1x256xf32>
    %6 = vector.shape_cast %5 : vector<1x256xf32> to vector<1x256xf32>
    %7 = vector.broadcast %6 : vector<1x256xf32> to vector<4x256xf32>
    %c0_4 = arith.constant 0 : index
    %c0_5 = arith.constant 0 : index
    %c0_6 = arith.constant 0 : index
    %8 = vector.load %arg3[%c0_4, %c0_5, %c0_6] : memref<4x4x1xf32, #tpu.memory_space<vmem>>, vector<1x4x1xf32>
    %9 = vector.shape_cast %8 : vector<1x4x1xf32> to vector<4x1xf32>
    %10 = vector.broadcast %9 : vector<4x1xf32> to vector<4x256xf32>
    %11 = arith.mulf %10, %7 : vector<4x256xf32>
    %12 = arith.addf %4, %11 : vector<4x256xf32>
    %13 = vector.extract_strided_slice %1 {offsets = [1, 0], sizes = [1, 256], strides = [1, 1]} : vector<4x256xf32> to vector<1x256xf32>
    %14 = vector.shape_cast %13 : vector<1x256xf32> to vector<1x256xf32>
    %15 = vector.broadcast %14 : vector<1x256xf32> to vector<4x256xf32>
    %c1 = arith.constant 1 : index
    %c0_7 = arith.constant 0 : index
    %c0_8 = arith.constant 0 : index
    %16 = vector.load %arg3[%c1, %c0_7, %c0_8] : memref<4x4x1xf32, #tpu.memory_space<vmem>>, vector<1x4x1xf32>
    %17 = vector.shape_cast %16 : vector<1x4x1xf32> to vector<4x1xf32>
    %18 = vector.broadcast %17 : vector<4x1xf32> to vector<4x256xf32>
    %19 = arith.mulf %18, %15 : vector<4x256xf32>
    %20 = arith.addf %12, %19 : vector<4x256xf32>
    %21 = vector.extract_strided_slice %1 {offsets = [2, 0], sizes = [1, 256], strides = [1, 1]} : vector<4x256xf32> to vector<1x256xf32>
    %22 = vector.shape_cast %21 : vector<1x256xf32> to vector<1x256xf32>
    %23 = vector.broadcast %22 : vector<1x256xf32> to vector<4x256xf32>
    %c2 = arith.constant 2 : index
    %c0_9 = arith.constant 0 : index
    %c0_10 = arith.constant 0 : index
    %24 = vector.load %arg3[%c2, %c0_9, %c0_10] : memref<4x4x1xf32, #tpu.memory_space<vmem>>, vector<1x4x1xf32>
    %25 = vector.shape_cast %24 : vector<1x4x1xf32> to vector<4x1xf32>
    %26 = vector.broadcast %25 : vector<4x1xf32> to vector<4x256xf32>
    %27 = arith.mulf %26, %23 : vector<4x256xf32>
    %28 = arith.addf %20, %27 : vector<4x256xf32>
    %29 = vector.extract_strided_slice %1 {offsets = [3, 0], sizes = [1, 256], strides = [1, 1]} : vector<4x256xf32> to vector<1x256xf32>
    %30 = vector.shape_cast %29 : vector<1x256xf32> to vector<1x256xf32>
    %31 = vector.broadcast %30 : vector<1x256xf32> to vector<4x256xf32>
    %c3 = arith.constant 3 : index
    %c0_11 = arith.constant 0 : index
    %c0_12 = arith.constant 0 : index
    %32 = vector.load %arg3[%c3, %c0_11, %c0_12] : memref<4x4x1xf32, #tpu.memory_space<vmem>>, vector<1x4x1xf32>
    %33 = vector.shape_cast %32 : vector<1x4x1xf32> to vector<4x1xf32>
    %34 = vector.broadcast %33 : vector<4x1xf32> to vector<4x256xf32>
    %35 = arith.mulf %34, %31 : vector<4x256xf32>
    %36 = arith.addf %28, %35 : vector<4x256xf32>
    %cst = arith.constant 0.000000e+00 : f32
    %37 = vector.broadcast %cst : f32 to vector<4x256xf32>
    %38 = arith.maximumf %36, %37 : vector<4x256xf32>
    %c0_13 = arith.constant 0 : index
    %c0_14 = arith.constant 0 : index
    %39 = vector.load %arg5[%c0_13, %c0_14] : memref<4x1xf32, #tpu.memory_space<vmem>>, vector<4x1xf32>
    %40 = vector.broadcast %39 : vector<4x1xf32> to vector<4x256xf32>
    %41 = arith.mulf %40, %38 : vector<4x256xf32>
    %cst_15 = arith.constant dense<0.000000e+00> : vector<256xf32>
    %42 = vector.multi_reduction <add>, %41, %cst_15 [0] : vector<4x256xf32> to vector<256xf32>
    %43 = vector.shape_cast %42 : vector<256xf32> to vector<1x256xf32>
    %c0_16 = arith.constant 0 : index
    %c0_17 = arith.constant 0 : index
    %44 = vector.load %arg6[%c0_16, %c0_17] : memref<1x1xf32, #tpu.memory_space<vmem>>, vector<1x1xf32>
    %45 = vector.broadcast %44 : vector<1x1xf32> to vector<1x256xf32>
    %46 = arith.addf %43, %45 : vector<1x256xf32>
    %cst_18 = arith.constant 0.000000e+00 : f32
    %47 = vector.broadcast %cst_18 : f32 to vector<1x256xf32>
    %48 = arith.subf %47, %46 : vector<1x256xf32>
    %49 = math.exp %48 : vector<1x256xf32>
    %cst_19 = arith.constant 1.000000e+00 : f32
    %50 = vector.broadcast %cst_19 : f32 to vector<1x256xf32>
    %51 = arith.addf %50, %49 : vector<1x256xf32>
    %52 = tpu.reciprocal %51 {approx = true} : vector<1x256xf32> -> vector<1x256xf32>
    %53 = arith.mulf %51, %52 : vector<1x256xf32>
    %cst_20 = arith.constant 2.000000e+00 : f32
    %54 = vector.broadcast %cst_20 : f32 to vector<1x256xf32>
    %55 = arith.subf %54, %53 : vector<1x256xf32>
    %56 = arith.mulf %52, %55 : vector<1x256xf32>
    %57 = vector.broadcast %56 : vector<1x256xf32> to vector<4x256xf32>
    %58 = arith.mulf %1, %57 : vector<4x256xf32>
    %c0_21 = arith.constant 0 : index
    %c0_22 = arith.constant 0 : index
    %c0_23 = arith.constant 0 : index
    %59 = vector.load %arg7[%c0_21, %c0_22, %c0_23] : memref<1x4x256xf32, #tpu.memory_space<vmem>>, vector<1x4x256xf32>
    %60 = vector.shape_cast %59 : vector<1x4x256xf32> to vector<4x256xf32>
    %61 = vector.shape_cast %58 : vector<4x256xf32> to vector<1x4x256xf32>
    tpu.vector_store %arg7[%c0_21, %c0_22, %c0_23], %61 {strides = array<i32>} : memref<1x4x256xf32, #tpu.memory_space<vmem>>, vector<1x4x256xf32>,
    return
  }
  func.func @transform_0(%arg0: i32, %arg1: i32) -> (i32, i32, i32) {
    %c0_i32 = arith.constant 0 : i32
    %c0_i32_0 = arith.constant 0 : i32
    return %arg0, %c0_i32, %arg1 : i32, i32, i32
  }
  func.func @transform_1(%arg0: i32, %arg1: i32) -> (i32, i32, i32) {
    %c0_i32 = arith.constant 0 : i32
    %c0_i32_0 = arith.constant 0 : i32
    %c0_i32_1 = arith.constant 0 : i32
    %c0_i32_2 = arith.constant 0 : i32
    return %c0_i32, %c0_i32_0, %c0_i32_1 : i32, i32, i32
  }
  func.func @transform_2(%arg0: i32, %arg1: i32) -> (i32, i32) {
    %c0_i32 = arith.constant 0 : i32
    %c0_i32_0 = arith.constant 0 : i32
    %c0_i32_1 = arith.constant 0 : i32
    return %c0_i32, %c0_i32_0 : i32, i32
  }
  func.func @transform_3(%arg0: i32, %arg1: i32) -> (i32, i32) {
    %c0_i32 = arith.constant 0 : i32
    %c0_i32_0 = arith.constant 0 : i32
    %c0_i32_1 = arith.constant 0 : i32
    return %c0_i32, %c0_i32_0 : i32, i32
  }
  func.func @transform_4(%arg0: i32, %arg1: i32) -> (i32, i32) {
    %c0_i32 = arith.constant 0 : i32
    %c0_i32_0 = arith.constant 0 : i32
    %c0_i32_1 = arith.constant 0 : i32
    return %c0_i32, %c0_i32_0 : i32, i32
  }
  func.func @transform_5(%arg0: i32, %arg1: i32) -> (i32, i32, i32) {
    %c0_i32 = arith.constant 0 : i32
    %c0_i32_0 = arith.constant 0 : i32
    return %arg0, %c0_i32, %arg1 : i32, i32, i32
  }
}

</mosaic_0001>

<llo_original>
// kernel: tpu_custom_call.1
$region0: #{tpu_custom_call.1}
  #allocation0 [shape = 'u32[]', space=smem, size = 0x4, offset = 0x4, fixed_abs, tag = 'smem constant byte address 0x4 - core index']
  #allocation1 [shape = 'u32[144,128]{1,0:T(1,128)}', space=vmem, size = 0x12000, scoped, tag = 'internal scratch']
  #allocation2 [shape = 'f32[1,1]{1,0:T(1,128)S(1)}', space=vmem, size = 0x200, scoped, tag = 'scoped memory for tpu_custom_call.1']
  %s0 = inlined_call_operand.vmem [shape: f32[2,4,256], index: 0, kind: input, shape index: {}]
  %s1 = inlined_call_operand.vmem [shape: f32[4,4,1], index: 1, kind: input, shape index: {}]
  %s2 = inlined_call_operand.vmem [shape: f32[4,1], index: 2, kind: input, shape index: {}]
  %s3 = inlined_call_operand.vmem [shape: f32[4,1], index: 3, kind: input, shape index: {}]
  %s4 = inlined_call_operand.<no memory space> [shape: f32[1,1], index: 4, kind: input, shape index: {}]
  %s5 = inlined_call_operand.hbm [shape: f32[2,4,256], index: 5, kind: output, shape index: {}]
  %s6 = sld [smem:[#allocation0]]
  $region53: #{tpu_custom_call.1} parent=0
    _
  %s8 = ssub.s32 1, %s6
  %s9 = scalar_select 0, %s8, %s6
  %v10 = vstv %s4
  %11 = vst [vmem:[#allocation2] sm:$0x1] %v10
  $region1: #{tpu_custom_call.1} parent=0
    #allocation3 [shape = 'u8[8192]{0}', space=vmem, size = 0x2000, scoped, tag = 'output window, operand 0']
    #allocation4 [shape = 's32[2]{0}', space=sflag, size = 0x8, scoped, tag = 'scoped memory for tpu_custom_call.1']
    %12 = vsyncpa [#allocation4], 0
    %s13 = scalar_lea.sflag [#allocation4], 1
    %14 = vsyncpa %s13, 0
    loop: start=0, step=1, limit=4
    $region2: #{tpu_custom_call.1} parent=1 // loop_pre_header
      _
    $region3: #{tpu_custom_call.1} parent=1 // loop_header
      %s16 = sphi 0, %s20
      %p17 = scmp.ge.s32.totalorder %s16, 4
      %s23 = sphi 0, %s35
      %s24 = sphi 0, %s31
      %s25 = sphi 0, %s23
      %s26 = sphi 0, %s24
      %s27 = sphi 0, %s25
      %s28 = sphi 0, %s26
      %s40 = sphi 0, %s42
      %s43 = sphi 0, %s40
      %s44 = sphi 0, %s43
      %s60 = sphi 0, %s44
      %s64 = sphi 0, %s64
      %s66 = sphi 0, %s64
      %s67 = sphi 0, %s66
      %s81 = sphi 0, %s67
      %s85 = sphi 0, %s85
      %s87 = sphi 0, %s85
      %s88 = sphi 0, %s87
      %s102 = sphi 0, %s88
      %s106 = sphi 0, %s106
      %s108 = sphi 0, %s106
      %s109 = sphi 0, %s108
      %s123 = sphi 0, %s109
      %s127 = sphi 0, %s127
      %s129 = sphi 0, %s127
      %s130 = sphi 0, %s129
      %s144 = sphi 0, %s130
      %s152 = sphi 0, %s154
      %s155 = sphi 0, %s152
      %s156 = sphi 0, %s155
      %s172 = sphi 0, %s156
    $region4: #{tpu_custom_call.1} parent=1 // loop_header_branch
      %19 = sbr.rel (%p17) target = $region8
    $region5: #{tpu_custom_call.1} parent=1 // loop_body
      %s21 = ssub.s32 %s16, 1
      %s22 = ssub.s32 %s16, 2
      %s29 = sadd.s32 1, %s24
      %p30 = scmp.ge.s32.totalorder %s29, 1
      %s31 = scalar_select %p30, 0, %s29
      %s32 = sadd.s32 1, %s23
      %s33 = scalar_select %p30, %s32, %s23
      %p34 = scmp.ge.s32.totalorder %s33, 2
      %s35 = scalar_select %p34, 0, %s33
      %s36 = ssub.s32 %s23, %s35
      %s37 = ssub.s32 %s24, %s31
      %s38 = sor.u32 %s36, %s37
      %p39 = scmp.eq.s32.totalorder %s38, 0
      %s41 = sadd.s32 %s40, 1
      %s42 = scalar_select %p39, %s40, %s41
      %p45 = pneg %p39
      %p46 = scmp.eq.s32.totalorder %s16, 1
      %p47 = por %p45, %p46
      %p48 = scmp.ne.s32.totalorder %s40, %s43
      %p49 = scmp.eq.s32.totalorder %s16, 0
      %p50 = por %p48, %p49
      %p51 = scmp.ne.s32.totalorder %s40, %s43
      %p52 = scmp.eq.s32.totalorder %s21, 1
      %p53 = por %p51, %p52
      %p54 = scmp.ne.s32.totalorder %s43, %s44
      %p55 = scmp.eq.s32.totalorder %s21, 0
      %p56 = por %p54, %p55
      %p57 = scmp.ne.s32.totalorder %s43, %s44
      %p58 = scmp.eq.s32.totalorder %s22, 1
      %p59 = por %p57, %p58
      %p61 = scmp.ne.s32.totalorder %s44, %s60
      %p62 = scmp.eq.s32.totalorder %s22, 0
      %p63 = por %p61, %p62
      %s65 = sadd.s32 %s64, 1
      %p68 = scmp.eq.s32.totalorder %s16, 1
      %p69 = scmp.ne.s32.totalorder %s64, %s66
      %p70 = scmp.eq.s32.totalorder %s16, 0
      %p71 = por %p69, %p70
      %p72 = scmp.ne.s32.totalorder %s64, %s66
      %p73 = scmp.eq.s32.totalorder %s21, 1
      %p74 = por %p72, %p73
      %p75 = scmp.ne.s32.totalorder %s66, %s67
      %p76 = scmp.eq.s32.totalorder %s21, 0
      %p77 = por %p75, %p76
      %p78 = scmp.ne.s32.totalorder %s66, %s67
      %p79 = scmp.eq.s32.totalorder %s22, 1
      %p80 = por %p78, %p79
      %p82 = scmp.ne.s32.totalorder %s67, %s81
      %p83 = scmp.eq.s32.totalorder %s22, 0
      %p84 = por %p82, %p83
      %s86 = sadd.s32 %s85, 1
      %p89 = scmp.eq.s32.totalorder %s16, 1
      %p90 = scmp.ne.s32.totalorder %s85, %s87
      %p91 = scmp.eq.s32.totalorder %s16, 0
      %p92 = por %p90, %p91
      %p93 = scmp.ne.s32.totalorder %s85, %s87
      %p94 = scmp.eq.s32.totalorder %s21, 1
      %p95 = por %p93, %p94
      %p96 = scmp.ne.s32.totalorder %s87, %s88
      %p97 = scmp.eq.s32.totalorder %s21, 0
      %p98 = por %p96, %p97
      %p99 = scmp.ne.s32.totalorder %s87, %s88
      %p100 = scmp.eq.s32.totalorder %s22, 1
      %p101 = por %p99, %p100
      %p103 = scmp.ne.s32.totalorder %s88, %s102
      %p104 = scmp.eq.s32.totalorder %s22, 0
      %p105 = por %p103, %p104
      %s107 = sadd.s32 %s106, 1
      %p110 = scmp.eq.s32.totalorder %s16, 1
      %p111 = scmp.ne.s32.totalorder %s106, %s108
      %p112 = scmp.eq.s32.totalorder %s16, 0
      %p113 = por %p111, %p112
      %p114 = scmp.ne.s32.totalorder %s106, %s108
      %p115 = scmp.eq.s32.totalorder %s21, 1
      %p116 = por %p114, %p115
      %p117 = scmp.ne.s32.totalorder %s108, %s109
      %p118 = scmp.eq.s32.totalorder %s21, 0
      %p119 = por %p117, %p118
      %p120 = scmp.ne.s32.totalorder %s108, %s109
      %p121 = scmp.eq.s32.totalorder %s22, 1
      %p122 = por %p120, %p121
      %p124 = scmp.ne.s32.totalorder %s109, %s123
      %p125 = scmp.eq.s32.totalorder %s22, 0
      %p126 = por %p124, %p125
      %s128 = sadd.s32 %s127, 1
      %p131 = scmp.eq.s32.totalorder %s16, 1
      %p132 = scmp.ne.s32.totalorder %s127, %s129
      %p133 = scmp.eq.s32.totalorder %s16, 0
      %p134 = por %p132, %p133
      %p135 = scmp.ne.s32.totalorder %s127, %s129
      %p136 = scmp.eq.s32.totalorder %s21, 1
      %p137 = por %p135, %p136
      %p138 = scmp.ne.s32.totalorder %s129, %s130
      %p139 = scmp.eq.s32.totalorder %s21, 0
      %p140 = por %p138, %p139
      %p141 = scmp.ne.s32.totalorder %s129, %s130
      %p142 = scmp.eq.s32.totalorder %s22, 1
      %p143 = por %p141, %p142
      %p145 = scmp.ne.s32.totalorder %s130, %s144
      %p146 = scmp.eq.s32.totalorder %s22, 0
      %p147 = por %p145, %p146
      %s148 = ssub.s32 %s23, %s35
      %s149 = ssub.s32 %s24, %s31
      %s150 = sor.u32 %s148, %s149
      %p151 = scmp.eq.s32.totalorder %s150, 0
      %s153 = sadd.s32 %s152, 1
      %s154 = scalar_select %p151, %s152, %s153
      %p157 = pneg %p151
      %p158 = scmp.eq.s32.totalorder %s16, 1
      %p159 = por %p157, %p158
      %p160 = scmp.ne.s32.totalorder %s152, %s155
      %p161 = scmp.eq.s32.totalorder %s16, 0
      %p162 = por %p160, %p161
      %p163 = scmp.ne.s32.totalorder %s152, %s155
      %p164 = scmp.eq.s32.totalorder %s21, 1
      %p165 = por %p163, %p164
      %p166 = scmp.ne.s32.totalorder %s155, %s156
      %p167 = scmp.eq.s32.totalorder %s21, 0
      %p168 = por %p166, %p167
      %p169 = scmp.ne.s32.totalorder %s155, %s156
      %p170 = scmp.eq.s32.totalorder %s22, 1
      %p171 = por %p169, %p170
      %p173 = scmp.ne.s32.totalorder %s156, %s172
      %p174 = scmp.eq.s32.totalorder %s22, 0
      %p175 = por %p173, %p174
      %p176 = scmp.le.s32.totalorder 1, %s16
      %p177 = scmp.lt.s32.totalorder %s16, 3
      %p178 = pnand %p176, %p177
      %p179 = pneg %p178
      // Predicated region
      $region9: #{tpu_custom_call.1} parent=5 // pred_check
        _
      $region10: #{tpu_custom_call.1} parent=5 // pred_check_branch
        %181 = sbr.rel (%p178) target = $region12
      $region11: #{tpu_custom_call.1} parent=5 // pred_region
        %s182 = ssub.s32 %s16, 1
        // Predicated region
        $region13: #{tpu_custom_call.1} parent=11 // pred_check
          %p183 = pneg %p77
        $region14: #{tpu_custom_call.1} parent=11 // pred_check_branch
          %185 = sbr.rel (%p183) target = $region16
        $region15: #{tpu_custom_call.1} parent=11 // pred_region
          _
        $region16: #{tpu_custom_call.1} parent=11 // pred_fallthru
          _
        // Predicated region
        $region17: #{tpu_custom_call.1} parent=11 // pred_check
          %p186 = pneg %p98
        $region18: #{tpu_custom_call.1} parent=11 // pred_check_branch
          %188 = sbr.rel (%p186) target = $region20
        $region19: #{tpu_custom_call.1} parent=11 // pred_region
          _
        $region20: #{tpu_custom_call.1} parent=11 // pred_fallthru
          _
        // Predicated region
        $region21: #{tpu_custom_call.1} parent=11 // pred_check
          %p189 = pneg %p119
        $region22: #{tpu_custom_call.1} parent=11 // pred_check_branch
          %191 = sbr.rel (%p189) target = $region24
        $region23: #{tpu_custom_call.1} parent=11 // pred_region
          _
        $region24: #{tpu_custom_call.1} parent=11 // pred_fallthru
          _
        // Predicated region
        $region25: #{tpu_custom_call.1} parent=11 // pred_check
          %p192 = pneg %p140
        $region26: #{tpu_custom_call.1} parent=11 // pred_check_branch
          %194 = sbr.rel (%p192) target = $region28
        $region27: #{tpu_custom_call.1} parent=11 // pred_region
          _
        $region28: #{tpu_custom_call.1} parent=11 // pred_fallthru
          _
      $region12: #{tpu_custom_call.1} parent=5 // pred_fallthru
        _
      %p195 = scmp.lt.s32.totalorder %s16, 2
      // Predicated region
      $region29: #{tpu_custom_call.1} parent=5 // pred_check
        %p196 = pneg %p195
      $region30: #{tpu_custom_call.1} parent=5 // pred_check_branch
        %198 = sbr.rel (%p196) target = $region32
      $region31: #{tpu_custom_call.1} parent=5 // pred_region
        // Predicated region
        $region33: #{tpu_custom_call.1} parent=31 // pred_check
          %p199 = pneg %p50
        $region34: #{tpu_custom_call.1} parent=31 // pred_check_branch
          %201 = sbr.rel (%p199) target = $region36
        $region35: #{tpu_custom_call.1} parent=31 // pred_region
          %s202 = smul.u32 2, %s24
          %p203 = scmp.lt.s32.totalorder %s23, 1
          %s204 = scalar_select %p203, %s23, 1
          %p205 = scmp.lt.s32.totalorder %s202, 1
          %s206 = scalar_select %p205, %s202, 1
          %s207 = smul.addr %s204, 2
          %s208 = sadd.s32 %s206, %s207
          %s209 = smul.addr %s208, 4
          %s210 = scalar_lea.vmem %s0, %s209
          %s211 = smul.u32 2, %s24
        $region36: #{tpu_custom_call.1} parent=31 // pred_fallthru
          _
      $region32: #{tpu_custom_call.1} parent=5 // pred_fallthru
        _
      %p212 = scmp.le.s32.totalorder 1, %s16
      %p213 = scmp.lt.s32.totalorder %s16, 3
      %p214 = pnand %p212, %p213
      %p215 = pneg %p214
      // Predicated region
      $region37: #{tpu_custom_call.1} parent=5 // pred_check
        _
      $region38: #{tpu_custom_call.1} parent=5 // pred_check_branch
        %217 = sbr.rel (%p214) target = $region40
      $region39: #{tpu_custom_call.1} parent=5 // pred_region
        %s218 = ssub.s32 %s16, 1
        %s219 = smul.u32 2, %s26
        %p220 = scmp.lt.s32.totalorder %s25, 1
        %s221 = scalar_select %p220, %s25, 1
        %p222 = scmp.lt.s32.totalorder %s219, 1
        %s223 = scalar_select %p222, %s219, 1
        %s224 = smul.addr %s221, 2
        %s225 = sadd.s32 %s223, %s224
        %s226 = smul.addr %s225, 4
        %s227 = scalar_lea.vmem %s0, %s226
        %p228 = pneg %p56
        %p229 = pneg %p53
        %p230 = pneg %p77
        %p231 = pneg %p74
        %p232 = pneg %p98
        %p233 = pneg %p95
        %p234 = pneg %p119
        %p235 = pneg %p116
        %p236 = pneg %p140
        %p237 = pneg %p137
        %p238 = pneg %p168
        %p239 = pneg %p165
        %s240 = sand.u32 %s155, 1
        %s241 = scalar_lea.sflag [#allocation4], %s240
        %s242 = sand.u32 %s155, 1
        %s243 = smul.addr %s242, 8
        %s244 = scalar_lea.vmem [#allocation3], %s243
        %s245 = smul.u32 2, %s26
        %p246 = scmp.lt.s32.totalorder %s25, 1
        %s247 = scalar_select %p246, %s25, 1
        %p248 = scmp.lt.s32.totalorder %s245, 1
        %s249 = scalar_select %p248, %s245, 1
        %s250 = smul.addr %s247, 2
        %s251 = sadd.s32 %s249, %s250
        %s252 = smul.addr %s251, 4
        %s253 = scalar_lea.vmem %s0, %s252
        %s254 = smul.u32 2, %s26
        %s255 = smul.u32 2, %s26
        %v256 = vld [vmem:[%s253] sm:$0xff]
        %v257 = vld [vmem:[%s2] sm:$0xf]
        %259 = vset.pattern.permute.xlu0 0
        %260 = vperm.xlu0 %259, %v257
        %v261 = vpop.permute.xlu0 %260
        %v264 = vlaneseq
        %v265 = vshrl.u32 %v264, 7
        %v266 = vsub.s32 0, %v265
        %v267 = vrot.slane %v256, %v266
        %v268 = vlaneseq
        %v269 = vshrl.u32 %v268, 7
        %v270 = vsub.s32 4, %v269
        %v271 = vrot.slane %v256, %v270
        %v274 = vlaneseq
        %v275 = vshrl.u32 %v274, 7
        %v276 = vsub.s32 0, %v275
        %v277 = vrot.slane %v267, %v276
        %v278 = vlaneseq
        %v279 = vshrl.u32 %v278, 7
        %v280 = vsub.s32 0, %v279
        %v281 = vrot.slane %v271, %v280
        %v282 = vld [vmem:[%s1] sm:$0xf]
        %284 = vset.pattern.permute.xlu0 0
        %285 = vperm.xlu0 %284, %v282
        %v286 = vpop.permute.xlu0 %285
        %v288 = vmul.f32 %v286, %v277
        %v289 = vmul.f32 %v286, %v281
        %v290 = vadd.f32 %v261, %v288
        %v291 = vadd.f32 %v261, %v289
        %v292 = vlaneseq
        %v293 = vshrl.u32 %v292, 7
        %v294 = vsub.s32 1, %v293
        %v295 = vrot.slane %v256, %v294
        %v296 = vlaneseq
        %v297 = vshrl.u32 %v296, 7
        %v298 = vsub.s32 5, %v297
        %v299 = vrot.slane %v256, %v298
        %v302 = vlaneseq
        %v303 = vshrl.u32 %v302, 7
        %v304 = vsub.s32 1, %v303
        %v305 = vrot.slane %v295, %v304
        %v306 = vlaneseq
        %v307 = vshrl.u32 %v306, 7
        %v308 = vsub.s32 1, %v307
        %v309 = vrot.slane %v299, %v308
        %s310 = scalar_lea.vmem %s1, 4
        %v311 = vld [vmem:[%s310] sm:$0xf]
        %313 = vset.pattern.permute.xlu0 0
        %314 = vperm.xlu0 %313, %v311
        %v315 = vpop.permute.xlu0 %314
        %v317 = vmul.f32 %v315, %v305
        %v318 = vmul.f32 %v315, %v309
        %v319 = vadd.f32 %v290, %v317
        %v320 = vadd.f32 %v291, %v318
        %v321 = vlaneseq
        %v322 = vshrl.u32 %v321, 7
        %v323 = vsub.s32 2, %v322
        %v324 = vrot.slane %v256, %v323
        %v325 = vlaneseq
        %v326 = vshrl.u32 %v325, 7
        %v327 = vsub.s32 6, %v326
        %v328 = vrot.slane %v256, %v327
        %v331 = vlaneseq
        %v332 = vshrl.u32 %v331, 7
        %v333 = vsub.s32 2, %v332
        %v334 = vrot.slane %v324, %v333
        %v335 = vlaneseq
        %v336 = vshrl.u32 %v335, 7
        %v337 = vsub.s32 2, %v336
        %v338 = vrot.slane %v328, %v337
        %s339 = scalar_lea.vmem %s1, 8
        %v340 = vld [vmem:[%s339] sm:$0xf]
        %342 = vset.pattern.permute.xlu0 0
        %343 = vperm.xlu0 %342, %v340
        %v344 = vpop.permute.xlu0 %343
        %v346 = vmul.f32 %v344, %v334
        %v347 = vmul.f32 %v344, %v338
        %v348 = vadd.f32 %v319, %v346
        %v349 = vadd.f32 %v320, %v347
        %v350 = vlaneseq
        %v351 = vshrl.u32 %v350, 7
        %v352 = vsub.s32 3, %v351
        %v353 = vrot.slane %v256, %v352
        %v354 = vlaneseq
        %v355 = vshrl.u32 %v354, 7
        %v356 = vsub.s32 7, %v355
        %v357 = vrot.slane %v256, %v356
        %v360 = vlaneseq
        %v361 = vshrl.u32 %v360, 7
        %v362 = vsub.s32 3, %v361
        %v363 = vrot.slane %v353, %v362
        %v364 = vlaneseq
        %v365 = vshrl.u32 %v364, 7
        %v366 = vsub.s32 3, %v365
        %v367 = vrot.slane %v357, %v366
        %s368 = scalar_lea.vmem %s1, 12
        %v369 = vld [vmem:[%s368] sm:$0xf]
        %371 = vset.pattern.permute.xlu0 0
        %372 = vperm.xlu0 %371, %v369
        %v373 = vpop.permute.xlu0 %372
        %v375 = vmul.f32 %v373, %v363
        %v376 = vmul.f32 %v373, %v367
        %v377 = vadd.f32 %v348, %v375
        %v378 = vadd.f32 %v349, %v376
        %v379 = vmax.f32 %v377, 0.0
        %v380 = vmax.f32 %v378, 0.0
        %v381 = vld [vmem:[%s3] sm:$0xf]
        %383 = vset.pattern.permute.xlu0 0
        %384 = vperm.xlu0 %383, %v381
        %v385 = vpop.permute.xlu0 %384
        %v387 = vmul.f32 %v385, %v379
        %v388 = vmul.f32 %v385, %v380
        %vm389 = vcmask 1043456
        %v390 = vsel %vm389, %v387, 0.0
        %v391 = vrot.slane %v390, 4
        %v392 = vadd.f32 %v390, %v391
        %v393 = vrot.slane %v392, 2
        %v394 = vadd.f32 %v392, %v393
        %v395 = vrot.slane %v394, 1
        %v396 = vadd.f32 %v394, %v395
        %v397 = vsel %vm389, %v388, 0.0
        %v398 = vrot.slane %v397, 4
        %v399 = vadd.f32 %v397, %v398
        %v400 = vrot.slane %v399, 2
        %v401 = vadd.f32 %v399, %v400
        %v402 = vrot.slane %v401, 1
        %v403 = vadd.f32 %v401, %v402
        %v404 = vld [vmem:[#allocation2] sm:$0x1]
        %406 = vset.pattern.permute.xlu0 0
        %407 = vperm.xlu0 %406, %v404
        %v408 = vpop.permute.xlu0 %407
        %v410 = vlaneseq
        %v411 = vshrl.u32 %v410, 7
        %v412 = vsub.s32 0, %v411
        %v413 = vrot.slane %v408, %v412
        %v414 = vadd.f32 %v396, %v413
        %v415 = vadd.f32 %v403, %v413
        %v416 = vsub.f32 0.0, %v414
        %v417 = vsub.f32 0.0, %v415
        %v418 = vmul.f32 %v416, 1.442695
        %v419 = vpow.pop %v418
        %v420 = vmul.f32 %v417, 1.442695
        %v421 = vpow.pop %v420
        %v422 = vadd.f32 %v419, 1.0
        %v423 = vadd.f32 %v421, 1.0
        %v424 = vrcp.pop %v422
        %v425 = vrcp.pop %v423
        %v426 = vmul.f32 %v422, %v424
        %v427 = vmul.f32 %v423, %v425
        %v428 = vsub.f32 2.0, %v426
        %v429 = vsub.f32 2.0, %v427
        %v430 = vmul.f32 %v424, %v428
        %v431 = vmul.f32 %v425, %v429
        %v434 = vcombine.low %v430, %v431
        %v436 = vmul.f32 %v256, %v434
        %437 = vst [vmem:[%s244] sm:$0xff] %v436
        %s438 = sand.u32 %s155, 1
        %s439 = scalar_lea.sflag [#allocation4], %s438
        %s440 = sand.u32 %s155, 1
        %s441 = smul.addr %s440, 8
        %s442 = scalar_lea.vmem [#allocation3], %s441
        // Predicated region
        $region41: #{tpu_custom_call.1} parent=39 // pred_check
          %p443 = pneg %p165
        $region42: #{tpu_custom_call.1} parent=39 // pred_check_branch
          %445 = sbr.rel (%p443) target = $region44
        $region43: #{tpu_custom_call.1} parent=39 // pred_region
          %s446 = smul.u32 2, %s26
          %s448 = ssub.s32 128, 128
          %449 = vsyncadd %s439, %s448
          %s450 = smul.addr %s25, 2
          %s451 = sadd.s32 %s446, %s450
          %s452 = smul.addr %s451, 64
          %s453 = scalar_lea.hbm %s5, %s452
          %s455 = sshll.u32 %s442, 4
          %s456 = int_to_ptr.vmem [resolvable:$true] %s455
          %458 = dma.vmem_to_hbm [thread:$0]  %s456, 128, %s453, %s439
        $region44: #{tpu_custom_call.1} parent=39 // pred_fallthru
          _
      $region40: #{tpu_custom_call.1} parent=5 // pred_fallthru
        _
      %p459 = scmp.le.s32.totalorder 2, %s16
      // Predicated region
      $region45: #{tpu_custom_call.1} parent=5 // pred_check
        %p460 = pneg %p459
      $region46: #{tpu_custom_call.1} parent=5 // pred_check_branch
        %462 = sbr.rel (%p460) target = $region48
      $region47: #{tpu_custom_call.1} parent=5 // pred_region
        %s463 = ssub.s32 %s16, 2
        // Predicated region
        $region49: #{tpu_custom_call.1} parent=47 // pred_check
          %p464 = pneg %p171
        $region50: #{tpu_custom_call.1} parent=47 // pred_check_branch
          %466 = sbr.rel (%p464) target = $region52
        $region51: #{tpu_custom_call.1} parent=47 // pred_region
          %s467 = sand.u32 %s156, 1
          %s468 = scalar_lea.sflag [#allocation4], %s467
          %s469 = sand.u32 %s156, 1
          %s470 = smul.addr %s469, 8
          %s471 = scalar_lea.vmem [#allocation3], %s470
          %472 = dma.done %s468, 128
        $region52: #{tpu_custom_call.1} parent=47 // pred_fallthru
          _
      $region48: #{tpu_custom_call.1} parent=5 // pred_fallthru
        _
    $region6: #{tpu_custom_call.1} parent=1 // loop_footer
      %s20 = sadd.s32 1, %s16
    $region7: #{tpu_custom_call.1} parent=1 // loop_footer_branch
      %15 = sbr.rel target = $region3
    $region8: #{tpu_custom_call.1} parent=1 // loop_exit
      _
    %473 = vsyncpa [#allocation4], 1
    %s474 = scalar_lea.sflag [#allocation4], 1
    %475 = vsyncpa %s474, 1

</llo_original>
